<compile_context>
chip_gen: v7x
topology: tpu7x:2x2x1
jax: 0.10.0
libtpu: 0.0.40
codegen_flags: <defaults>
</compile_context>

<pallas_src>
import functools

import jax
import jax.numpy as jnp
from jax.experimental import pallas as pl
from jax.experimental.pallas import tpu as pltpu

ALPHA = 0.8
GAMMA = 2
MAX_TILE_ELEMS = 512 * 1024   # per-input tile cap (f32: 2 MiB); 2 inputs x 2
                              # pipeline buffers = 8 MiB << v5e 16 MiB scoped.


def _round_up(x, m):
    return -(-x // m) * m


def _grid_parallelism():
    """(n_splits, dimension_semantics) for the current chip.

    v7x has 2 TensorCores per device and only CORE_PARALLEL actually shards a
    grid axis across them; v5e/v6e are single-TC, where a split is pure
    serialization (wasted duplicate-block traffic), so use 1 split there.
    """
    kind = jax.devices()[0].device_kind.lower()
    if "v7" in kind or "tpu7" in kind:
        return 2, (pltpu.CORE_PARALLEL, pltpu.ARBITRARY)
    return 1, ("arbitrary", "arbitrary")


def _focal_bce_kernel(x_ref, t_ref, acc_ref, *, blocks_per_split, total_blocks,
                      full_blocks, rem_rows, need_mask):
    c = pl.program_id(0)   # core-split index
    j = pl.program_id(1)   # sequential reduction step ("arbitrary")

    @pl.when(j == 0)
    def _():
        acc_ref[...] = jnp.zeros_like(acc_ref)

    x = x_ref[...].astype(jnp.float32)
    t = t_ref[...].astype(jnp.float32)

    # softplus(x) = relu(x) + log(1 + exp(-|x|))   -- 2 EUP transcendentals.
    sp = jnp.maximum(x, 0.0) + jnp.log(1.0 + jnp.exp(-jnp.abs(x)))
    # Folded BCE with PyTorch's clamp(log, -100):
    #   -t*max(log p, -100) - (1-t)*max(log(1-p), -100)
    # = t*min(sp - x, 100) + (1 - t)*min(sp, 100)
    bce = t * jnp.minimum(sp - x, 100.0) + (1.0 - t) * jnp.minimum(sp, 100.0)

    def accumulate(vals):
        # (TILE_R, W) -> (TILE_R//8, 8, W) -> summed to (8, W): pure vreg-wise
        # VPU adds into the resident output accumulator.
        acc_ref[...] += vals.reshape(-1, 8, vals.shape[-1]).sum(axis=0)

    if need_mask:
        b = c * blocks_per_split + j   # global block index

        @pl.when(b < full_blocks)
        def _():
            accumulate(bce)

        @pl.when(b >= full_blocks)
        def _():
            # Only the ragged last block (and clamped out-of-range duplicate
            # blocks) pay for masking.  Use a where-select (not a multiply) so
            # NaN/Inf from OOB garbage rows is safely discarded.
            rows_i = jax.lax.broadcasted_iota(jnp.int32, bce.shape, 0)
            valid = (b == total_blocks - 1) & (rows_i < rem_rows)
            accumulate(jnp.where(valid, bce, 0.0))
    else:
        accumulate(bce)


def focal_loss(inputs, targets, alpha=ALPHA, gamma=GAMMA):
    """inputs: any-shaped logits; targets: {0,1} masks (f32/bf16/int ok)."""
    n_elems = inputs.size

    # Collapse LEADING dims only; keep the real trailing dim as the lane axis.
    # This reshape is layout-free on TPU tiled layouts (no relayout copy), so
    # nothing but the pallas_call itself touches HBM.
    if inputs.ndim >= 2:
        w = inputs.shape[-1]
        x2 = inputs.reshape(-1, w)
        t2 = targets.reshape(-1, w)
    else:
        x2 = inputs.reshape(1, -1)
        t2 = targets.reshape(1, -1)
        w = x2.shape[1]
    rows = x2.shape[0]

    # Tile: as many 8-row groups as fit the per-input element budget.
    tile_r = min(_round_up(rows, 8), max(8, (MAX_TILE_ELEMS // w) // 8 * 8))
    total_blocks = -(-rows // tile_r)

    n_splits, dim_sems = _grid_parallelism()
    if total_blocks < 2:
        n_splits = 1
    if n_splits == 1:
        dim_sems = ("arbitrary", "arbitrary")
    blocks_per_split = -(-total_blocks // n_splits)

    rem_rows = rows - (total_blocks - 1) * tile_r           # rows in last block
    full_blocks = total_blocks if rem_rows == tile_r else total_blocks - 1
    need_mask = full_blocks < n_splits * blocks_per_split

    if n_splits * blocks_per_split == total_blocks:
        def in_map(c, j):
            return (c * blocks_per_split + j, 0)
    else:
        def in_map(c, j):
            # Clamp out-of-range trailing blocks onto the last real block; the
            # kernel masks their contribution to zero.
            return (jnp.minimum(c * blocks_per_split + j, total_blocks - 1), 0)

    partials = pl.pallas_call(
        functools.partial(
            _focal_bce_kernel,
            blocks_per_split=blocks_per_split,
            total_blocks=total_blocks,
            full_blocks=full_blocks,
            rem_rows=rem_rows,
            need_mask=need_mask,
        ),
        out_shape=jax.ShapeDtypeStruct((8 * n_splits, w), jnp.float32),
        grid_spec=pltpu.PrefetchScalarGridSpec(
            num_scalar_prefetch=0,
            grid=(n_splits, blocks_per_split),
            in_specs=[
                pl.BlockSpec((tile_r, w), in_map),
                pl.BlockSpec((tile_r, w), in_map),
            ],
            out_specs=pl.BlockSpec((8, w), lambda c, j: (c, 0)),
        ),
        compiler_params=pltpu.CompilerParams(dimension_semantics=dim_sems),
    )(x2, t2)

    # Tiny final reduction + focal formula (scalar work) in plain XLA.
    bce_mean = jnp.sum(partials) / jnp.float32(n_elems)
    bce_exp = jnp.exp(-bce_mean)
    one_m = 1.0 - bce_exp
    pw = one_m * one_m if gamma == 2 else one_m ** gamma   # avoid float pow
    return alpha * pw * bce_mean


def focal_loss_ref(inputs, targets, alpha=ALPHA, gamma=GAMMA):
    # Mirrors PyTorch: sigmoid -> binary_cross_entropy (log clamped at -100,
    # mean reduction) -> focal formula.
    p = jax.nn.sigmoid(inputs.reshape(-1).astype(jnp.float32))
    t = targets.reshape(-1).astype(jnp.float32)
    log_p = jnp.maximum(jnp.log(p), -100.0)
    log_1mp = jnp.maximum(jnp.log(1.0 - p), -100.0)
    bce = jnp.mean(-(t * log_p + (1.0 - t) * log_1mp))
    bce_exp = jnp.exp(-bce)
    return alpha * (1.0 - bce_exp) ** gamma * bce


if __name__ == "__main__":
    key = jax.random.PRNGKey(0)
    k1, k2 = jax.random.split(key)
    # NCHW logits and binary targets, as the PyTorch module expects.
    x = jax.random.normal(k1, (2, 4, 16, 16), dtype=jnp.float32)
    tgt = (jax.random.uniform(k2, (2, 4, 16, 16)) > 0.5).astype(jnp.float32)

    loss_fn = jax.jit(focal_loss)

    out = jax.block_until_ready(loss_fn(x, tgt))
    ref = focal_loss_ref(x, tgt)
    assert jnp.allclose(out, ref, atol=1e-5, rtol=1e-5), (out, ref)

    # Narrow-dtype targets pass straight through to the kernel (no wrapper-side
    # astype / extra HBM pass); {0,1} is exact in bf16 so the result matches.
    out_bf16_t = jax.block_until_ready(loss_fn(x, tgt.astype(jnp.bfloat16)))
    assert jnp.allclose(out_bf16_t, ref, atol=1e-5, rtol=1e-5), (out_bf16_t, ref)

    print("KERNEL_OK")
</pallas_src>

<mosaic_0001>
module attributes {stable_mosaic.version = 11 : i64} {
  func.func @_focal_bce_kernel(%arg0: i32, %arg1: i32, %arg2: memref<128x16xf32, #tpu.memory_space<vmem>>, %arg3: memref<128x16xf32, #tpu.memory_space<vmem>>, %arg4: memref<8x16xf32, #tpu.memory_space<vmem>>) attributes {dimension_semantics = [#tpu.dimension_semantics<arbitrary>, #tpu.dimension_semantics<arbitrary>], iteration_bounds = array<i64: 1, 1>, scalar_prefetch = 0 : i64, scratch_operands = 0 : i64, tpu.core_type = #tpu.core_type<tc>, window_params = [{transform_indices = @transform_0, window_bounds = array<i64: 128, 16>}, {transform_indices = @transform_1, window_bounds = array<i64: 128, 16>}, {transform_indices = @transform_2, window_bounds = array<i64: 8, 16>}]} {
    %c0_i32 = arith.constant 0 : i32
    %0 = arith.cmpi eq, %arg1, %c0_i32 : i32
    %1 = arith.extui %0 : i1 to i32
    %c0_i32_0 = arith.constant 0 : i32
    %2 = arith.cmpi ne, %1, %c0_i32_0 : i32
    scf.if %2 {
      %cst_14 = arith.constant 0.000000e+00 : f32
      %30 = vector.broadcast %cst_14 : f32 to vector<8x16xf32>
      %c0_15 = arith.constant 0 : index
      %c0_16 = arith.constant 0 : index
      %31 = vector.load %arg4[%c0_15, %c0_16] : memref<8x16xf32, #tpu.memory_space<vmem>>, vector<8x16xf32>
      tpu.vector_store %arg4[%c0_15, %c0_16], %30 {strides = array<i32>} : memref<8x16xf32, #tpu.memory_space<vmem>>, vector<8x16xf32>,
    } else {
    }
    %c0 = arith.constant 0 : index
    %c0_1 = arith.constant 0 : index
    %3 = vector.load %arg2[%c0, %c0_1] : memref<128x16xf32, #tpu.memory_space<vmem>>, vector<128x16xf32>
    %c0_2 = arith.constant 0 : index
    %c0_3 = arith.constant 0 : index
    %4 = vector.load %arg3[%c0_2, %c0_3] : memref<128x16xf32, #tpu.memory_space<vmem>>, vector<128x16xf32>
    %cst = arith.constant 0.000000e+00 : f32
    %5 = vector.broadcast %cst : f32 to vector<128x16xf32>
    %6 = arith.maximumf %3, %5 : vector<128x16xf32>
    %7 = math.absf %3 : vector<128x16xf32>
    %cst_4 = arith.constant 0.000000e+00 : f32
    %8 = vector.broadcast %cst_4 : f32 to vector<128x16xf32>
    %9 = arith.subf %8, %7 : vector<128x16xf32>
    %10 = math.exp %9 : vector<128x16xf32>
    %cst_5 = arith.constant 1.000000e+00 : f32
    %11 = vector.broadcast %cst_5 : f32 to vector<128x16xf32>
    %12 = arith.addf %11, %10 : vector<128x16xf32>
    %13 = math.log %12 : vector<128x16xf32>
    %14 = arith.addf %6, %13 : vector<128x16xf32>
    %15 = arith.subf %14, %3 : vector<128x16xf32>
    %cst_6 = arith.constant 1.000000e+02 : f32
    %16 = vector.broadcast %cst_6 : f32 to vector<128x16xf32>
    %17 = arith.minimumf %15, %16 : vector<128x16xf32>
    %18 = arith.mulf %4, %17 : vector<128x16xf32>
    %cst_7 = arith.constant 1.000000e+00 : f32
    %19 = vector.broadcast %cst_7 : f32 to vector<128x16xf32>
    %20 = arith.subf %19, %4 : vector<128x16xf32>
    %cst_8 = arith.constant 1.000000e+02 : f32
    %21 = vector.broadcast %cst_8 : f32 to vector<128x16xf32>
    %22 = arith.minimumf %14, %21 : vector<128x16xf32>
    %23 = arith.mulf %20, %22 : vector<128x16xf32>
    %24 = arith.addf %18, %23 : vector<128x16xf32>
    %c0_9 = arith.constant 0 : index
    %c0_10 = arith.constant 0 : index
    %25 = vector.load %arg4[%c0_9, %c0_10] : memref<8x16xf32, #tpu.memory_space<vmem>>, vector<8x16xf32>
    %26 = vector.shape_cast %24 : vector<128x16xf32> to vector<16x8x16xf32>
    %cst_11 = arith.constant dense<0.000000e+00> : vector<8x16xf32>
    %27 = vector.multi_reduction <add>, %26, %cst_11 [0] : vector<16x8x16xf32> to vector<8x16xf32>
    %28 = arith.addf %25, %27 : vector<8x16xf32>
    %c0_12 = arith.constant 0 : index
    %c0_13 = arith.constant 0 : index
    %29 = vector.load %arg4[%c0_12, %c0_13] : memref<8x16xf32, #tpu.memory_space<vmem>>, vector<8x16xf32>
    tpu.vector_store %arg4[%c0_12, %c0_13], %28 {strides = array<i32>} : memref<8x16xf32, #tpu.memory_space<vmem>>, vector<8x16xf32>,
    return
  }
  func.func @transform_0(%arg0: i32, %arg1: i32) -> (i32, i32) {
    %c1_i32 = arith.constant 1 : i32
    %0 = arith.muli %arg0, %c1_i32 : i32
    %1 = arith.addi %0, %arg1 : i32
    %c0_i32 = arith.constant 0 : i32
    %c0_i32_0 = arith.constant 0 : i32
    return %1, %c0_i32 : i32, i32
  }
  func.func @transform_1(%arg0: i32, %arg1: i32) -> (i32, i32) {
    %c1_i32 = arith.constant 1 : i32
    %0 = arith.muli %arg0, %c1_i32 : i32
    %1 = arith.addi %0, %arg1 : i32
    %c0_i32 = arith.constant 0 : i32
    %c0_i32_0 = arith.constant 0 : i32
    return %1, %c0_i32 : i32, i32
  }
  func.func @transform_2(%arg0: i32, %arg1: i32) -> (i32, i32) {
    %c0_i32 = arith.constant 0 : i32
    %c0_i32_0 = arith.constant 0 : i32
    return %arg0, %c0_i32 : i32, i32
  }
}

</mosaic_0001>

<llo_original>
// kernel: focal_loss.1
$region0: #{focal_loss.1}
  #allocation0 [shape = 'u32[]', space=smem, size = 0x4, offset = 0x4, fixed_abs, tag = 'smem constant byte address 0x4 - core index']
  #allocation1 [shape = 'u32[144,128]{1,0:T(1,128)}', space=vmem, size = 0x12000, scoped, tag = 'internal scratch']
  %s0 = inlined_call_operand.hbm [shape: f32[128,16], index: 0, kind: input, shape index: {}]
  %s1 = inlined_call_operand.hbm [shape: f32[128,16], index: 1, kind: input, shape index: {}]
  %s2 = inlined_call_operand.vmem [shape: f32[8,16], index: 2, kind: output, shape index: {}]
  %s3 = sld [smem:[#allocation0]]
  $region30: #{focal_loss.1} parent=0
    _
  %s5 = ssub.s32 1, %s3
  %s6 = scalar_select 0, %s5, %s3
  $region1: #{focal_loss.1} parent=0
    #allocation2 [shape = 'u8[65536]{0}', space=vmem, size = 0x10000, scoped, tag = 'input window, operand 0, single buffered']
    #allocation3 [shape = 's32[1]{0}', space=sflag, size = 0x4, scoped, tag = 'scoped memory for focal_loss.1']
    #allocation4 [shape = 'u8[65536]{0}', space=vmem, size = 0x10000, scoped, tag = 'input window, operand 1, single buffered']
    #allocation5 [shape = 's32[1]{0}', space=sflag, size = 0x4, scoped, tag = 'scoped memory for focal_loss.1']
    %7 = vsyncpa [#allocation3], 0
    %8 = vsyncpa [#allocation5], 0
    // Predicated region
    $region2: #{focal_loss.1} parent=1 // pred_check
      _
    $region3: #{focal_loss.1} parent=1 // pred_check_branch
      %10 = sbr.rel (0) target = $region5
    $region4: #{focal_loss.1} parent=1 // pred_region
      %s11 = sadd.s32 0, 0
      %s12 = smul.u32 16, %s11
      %s14 = ssub.s32 2048, 2048
      %15 = vsyncadd [#allocation3], %s14
      %s16 = smul.addr %s12, 128
      %s17 = scalar_lea.hbm %s0, %s16
      %s18 = sshll.u32 [#allocation2], 4
      %s19 = int_to_ptr.vmem [resolvable:$true] %s18
      %24 = dma.hbm_to_vmem [thread:$0]  %s17, 2048, %s19, [#allocation3], 128, 128, 8
    $region5: #{focal_loss.1} parent=1 // pred_fallthru
      _
    // Predicated region
    $region6: #{focal_loss.1} parent=1 // pred_check
      _
    $region7: #{focal_loss.1} parent=1 // pred_check_branch
      %26 = sbr.rel (0) target = $region9
    $region8: #{focal_loss.1} parent=1 // pred_region
      %s27 = sadd.s32 0, 0
      %s28 = smul.u32 16, %s27
      %s30 = ssub.s32 2048, 2048
      %31 = vsyncadd [#allocation5], %s30
      %s32 = smul.addr %s28, 128
      %s33 = scalar_lea.hbm %s1, %s32
      %s34 = sshll.u32 [#allocation4], 4
      %s35 = int_to_ptr.vmem [resolvable:$true] %s34
      %40 = dma.hbm_to_vmem [thread:$0]  %s33, 2048, %s35, [#allocation5], 128, 128, 8
    $region9: #{focal_loss.1} parent=1 // pred_fallthru
      _
    // Predicated region
    $region10: #{focal_loss.1} parent=1 // pred_check
      _
    $region11: #{focal_loss.1} parent=1 // pred_check_branch
      %42 = sbr.rel (0) target = $region13
    $region12: #{focal_loss.1} parent=1 // pred_region
      %43 = dma.done [#allocation3], 2048
    $region13: #{focal_loss.1} parent=1 // pred_fallthru
      _
    // Predicated region
    $region14: #{focal_loss.1} parent=1 // pred_check
      _
    $region15: #{focal_loss.1} parent=1 // pred_check_branch
      %45 = sbr.rel (0) target = $region17
    $region16: #{focal_loss.1} parent=1 // pred_region
      %46 = dma.done [#allocation5], 2048
    $region17: #{focal_loss.1} parent=1 // pred_fallthru
      _
    %s47 = sadd.s32 0, 0
    %s48 = smul.u32 16, %s47
    %s49 = sadd.s32 0, 0
    %s50 = smul.u32 16, %s49
    %p51 = scmp.eq.s32.totalorder 0, 0
    // Predicated region
    $region18: #{focal_loss.1} parent=1 // pred_check
      %p52 = pneg %p51
    $region19: #{focal_loss.1} parent=1 // pred_check_branch
      %54 = sbr.rel (%p52) target = $region21
    $region20: #{focal_loss.1} parent=1 // pred_region
      %vm55 = vcmask 130048
      %56 = vst.msk [vmem:[%s2] sm:$0xff] %vm55, 0.0
    $region21: #{focal_loss.1} parent=1 // pred_fallthru
      _
    %v57 = vld [vmem:[#allocation2] sm:$0xff]
    %v58 = vld [vmem:[#allocation2 + $0x8] sm:$0xff]
    %v59 = vld [vmem:[#allocation2 + $0x10] sm:$0xff]
    %v60 = vld [vmem:[#allocation2 + $0x18] sm:$0xff]
    %v61 = vld [vmem:[#allocation2 + $0x20] sm:$0xff]
    %v62 = vld [vmem:[#allocation2 + $0x28] sm:$0xff]
    %v63 = vld [vmem:[#allocation2 + $0x30] sm:$0xff]
    %v64 = vld [vmem:[#allocation2 + $0x38] sm:$0xff]
    %v65 = vld [vmem:[#allocation2 + $0x40] sm:$0xff]
    %v66 = vld [vmem:[#allocation2 + $0x48] sm:$0xff]
    %v67 = vld [vmem:[#allocation2 + $0x50] sm:$0xff]
    %v68 = vld [vmem:[#allocation2 + $0x58] sm:$0xff]
    %v69 = vld [vmem:[#allocation2 + $0x60] sm:$0xff]
    %v70 = vld [vmem:[#allocation2 + $0x68] sm:$0xff]
    %v71 = vld [vmem:[#allocation2 + $0x70] sm:$0xff]
    %v72 = vld [vmem:[#allocation2 + $0x78] sm:$0xff]
    %v73 = vld [vmem:[#allocation4] sm:$0xff]
    %v74 = vld [vmem:[#allocation4 + $0x8] sm:$0xff]
    %v75 = vld [vmem:[#allocation4 + $0x10] sm:$0xff]
    %v76 = vld [vmem:[#allocation4 + $0x18] sm:$0xff]
    %v77 = vld [vmem:[#allocation4 + $0x20] sm:$0xff]
    %v78 = vld [vmem:[#allocation4 + $0x28] sm:$0xff]
    %v79 = vld [vmem:[#allocation4 + $0x30] sm:$0xff]
    %v80 = vld [vmem:[#allocation4 + $0x38] sm:$0xff]
    %v81 = vld [vmem:[#allocation4 + $0x40] sm:$0xff]
    %v82 = vld [vmem:[#allocation4 + $0x48] sm:$0xff]
    %v83 = vld [vmem:[#allocation4 + $0x50] sm:$0xff]
    %v84 = vld [vmem:[#allocation4 + $0x58] sm:$0xff]
    %v85 = vld [vmem:[#allocation4 + $0x60] sm:$0xff]
    %v86 = vld [vmem:[#allocation4 + $0x68] sm:$0xff]
    %v87 = vld [vmem:[#allocation4 + $0x70] sm:$0xff]
    %v88 = vld [vmem:[#allocation4 + $0x78] sm:$0xff]
    %v89 = vmax.f32 %v57, 0.0
    %v90 = vmax.f32 %v58, 0.0
    %v91 = vmax.f32 %v59, 0.0
    %v92 = vmax.f32 %v60, 0.0
    %v93 = vmax.f32 %v61, 0.0
    %v94 = vmax.f32 %v62, 0.0
    %v95 = vmax.f32 %v63, 0.0
    %v96 = vmax.f32 %v64, 0.0
    %v97 = vmax.f32 %v65, 0.0
    %v98 = vmax.f32 %v66, 0.0
    %v99 = vmax.f32 %v67, 0.0
    %v100 = vmax.f32 %v68, 0.0
    %v101 = vmax.f32 %v69, 0.0
    %v102 = vmax.f32 %v70, 0.0
    %v103 = vmax.f32 %v71, 0.0
    %v104 = vmax.f32 %v72, 0.0
    %v105 = vand.u32 2147483647, %v57
    %v106 = vand.u32 2147483647, %v58
    %v107 = vand.u32 2147483647, %v59
    %v108 = vand.u32 2147483647, %v60
    %v109 = vand.u32 2147483647, %v61
    %v110 = vand.u32 2147483647, %v62
    %v111 = vand.u32 2147483647, %v63
    %v112 = vand.u32 2147483647, %v64
    %v113 = vand.u32 2147483647, %v65
    %v114 = vand.u32 2147483647, %v66
    %v115 = vand.u32 2147483647, %v67
    %v116 = vand.u32 2147483647, %v68
    %v117 = vand.u32 2147483647, %v69
    %v118 = vand.u32 2147483647, %v70
    %v119 = vand.u32 2147483647, %v71
    %v120 = vand.u32 2147483647, %v72
    %v121 = vsub.f32 0.0, %v105
    %v122 = vsub.f32 0.0, %v106
    %v123 = vsub.f32 0.0, %v107
    %v124 = vsub.f32 0.0, %v108
    %v125 = vsub.f32 0.0, %v109
    %v126 = vsub.f32 0.0, %v110
    %v127 = vsub.f32 0.0, %v111
    %v128 = vsub.f32 0.0, %v112
    %v129 = vsub.f32 0.0, %v113
    %v130 = vsub.f32 0.0, %v114
    %v131 = vsub.f32 0.0, %v115
    %v132 = vsub.f32 0.0, %v116
    %v133 = vsub.f32 0.0, %v117
    %v134 = vsub.f32 0.0, %v118
    %v135 = vsub.f32 0.0, %v119
    %v136 = vsub.f32 0.0, %v120
    %v137 = vmul.f32 %v121, 1.442695
    %v138 = vpow.pop %v137
    %v139 = vmul.f32 %v122, 1.442695
    %v140 = vpow.pop %v139
    %v141 = vmul.f32 %v123, 1.442695
    %v142 = vpow.pop %v141
    %v143 = vmul.f32 %v124, 1.442695
    %v144 = vpow.pop %v143
    %v145 = vmul.f32 %v125, 1.442695
    %v146 = vpow.pop %v145
    %v147 = vmul.f32 %v126, 1.442695
    %v148 = vpow.pop %v147
    %v149 = vmul.f32 %v127, 1.442695
    %v150 = vpow.pop %v149
    %v151 = vmul.f32 %v128, 1.442695
    %v152 = vpow.pop %v151
    %v153 = vmul.f32 %v129, 1.442695
    %v154 = vpow.pop %v153
    %v155 = vmul.f32 %v130, 1.442695
    %v156 = vpow.pop %v155
    %v157 = vmul.f32 %v131, 1.442695
    %v158 = vpow.pop %v157
    %v159 = vmul.f32 %v132, 1.442695
    %v160 = vpow.pop %v159
    %v161 = vmul.f32 %v133, 1.442695
    %v162 = vpow.pop %v161
    %v163 = vmul.f32 %v134, 1.442695
    %v164 = vpow.pop %v163
    %v165 = vmul.f32 %v135, 1.442695
    %v166 = vpow.pop %v165
    %v167 = vmul.f32 %v136, 1.442695
    %v168 = vpow.pop %v167
    %v169 = vadd.f32 %v138, 1.0
    %v170 = vadd.f32 %v140, 1.0
    %v171 = vadd.f32 %v142, 1.0
    %v172 = vadd.f32 %v144, 1.0
    %v173 = vadd.f32 %v146, 1.0
    %v174 = vadd.f32 %v148, 1.0
    %v175 = vadd.f32 %v150, 1.0
    %v176 = vadd.f32 %v152, 1.0
    %v177 = vadd.f32 %v154, 1.0
    %v178 = vadd.f32 %v156, 1.0
    %v179 = vadd.f32 %v158, 1.0
    %v180 = vadd.f32 %v160, 1.0
    %v181 = vadd.f32 %v162, 1.0
    %v182 = vadd.f32 %v164, 1.0
    %v183 = vadd.f32 %v166, 1.0
    %v184 = vadd.f32 %v168, 1.0
    %v185 = vlog2.pop %v169
    %v186 = vmul.f32 %v185, 0.6931472
    %v187 = vlog2.pop %v170
    %v188 = vmul.f32 %v187, 0.6931472
    %v189 = vlog2.pop %v171
    %v190 = vmul.f32 %v189, 0.6931472
    %v191 = vlog2.pop %v172
    %v192 = vmul.f32 %v191, 0.6931472
    %v193 = vlog2.pop %v173
    %v194 = vmul.f32 %v193, 0.6931472
    %v195 = vlog2.pop %v174
    %v196 = vmul.f32 %v195, 0.6931472
    %v197 = vlog2.pop %v175
    %v198 = vmul.f32 %v197, 0.6931472
    %v199 = vlog2.pop %v176
    %v200 = vmul.f32 %v199, 0.6931472
    %v201 = vlog2.pop %v177
    %v202 = vmul.f32 %v201, 0.6931472
    %v203 = vlog2.pop %v178
    %v204 = vmul.f32 %v203, 0.6931472
    %v205 = vlog2.pop %v179
    %v206 = vmul.f32 %v205, 0.6931472
    %v207 = vlog2.pop %v180
    %v208 = vmul.f32 %v207, 0.6931472
    %v209 = vlog2.pop %v181
    %v210 = vmul.f32 %v209, 0.6931472
    %v211 = vlog2.pop %v182
    %v212 = vmul.f32 %v211, 0.6931472
    %v213 = vlog2.pop %v183
    %v214 = vmul.f32 %v213, 0.6931472
    %v215 = vlog2.pop %v184
    %v216 = vmul.f32 %v215, 0.6931472
    %v217 = vadd.f32 %v89, %v186
    %v218 = vadd.f32 %v90, %v188
    %v219 = vadd.f32 %v91, %v190
    %v220 = vadd.f32 %v92, %v192
    %v221 = vadd.f32 %v93, %v194
    %v222 = vadd.f32 %v94, %v196
    %v223 = vadd.f32 %v95, %v198
    %v224 = vadd.f32 %v96, %v200
    %v225 = vadd.f32 %v97, %v202
    %v226 = vadd.f32 %v98, %v204
    %v227 = vadd.f32 %v99, %v206
    %v228 = vadd.f32 %v100, %v208
    %v229 = vadd.f32 %v101, %v210
    %v230 = vadd.f32 %v102, %v212
    %v231 = vadd.f32 %v103, %v214
    %v232 = vadd.f32 %v104, %v216
    %v233 = vsub.f32 %v217, %v57
    %v234 = vsub.f32 %v218, %v58
    %v235 = vsub.f32 %v219, %v59
    %v236 = vsub.f32 %v220, %v60
    %v237 = vsub.f32 %v221, %v61
    %v238 = vsub.f32 %v222, %v62
    %v239 = vsub.f32 %v223, %v63
    %v240 = vsub.f32 %v224, %v64
    %v241 = vsub.f32 %v225, %v65
    %v242 = vsub.f32 %v226, %v66
    %v243 = vsub.f32 %v227, %v67
    %v244 = vsub.f32 %v228, %v68
    %v245 = vsub.f32 %v229, %v69
    %v246 = vsub.f32 %v230, %v70
    %v247 = vsub.f32 %v231, %v71
    %v248 = vsub.f32 %v232, %v72
    %v249 = vmin.f32 %v233, 100.0
    %v250 = vmin.f32 %v234, 100.0
    %v251 = vmin.f32 %v235, 100.0
    %v252 = vmin.f32 %v236, 100.0
    %v253 = vmin.f32 %v237, 100.0
    %v254 = vmin.f32 %v238, 100.0
    %v255 = vmin.f32 %v239, 100.0
    %v256 = vmin.f32 %v240, 100.0
    %v257 = vmin.f32 %v241, 100.0
    %v258 = vmin.f32 %v242, 100.0
    %v259 = vmin.f32 %v243, 100.0
    %v260 = vmin.f32 %v244, 100.0
    %v261 = vmin.f32 %v245, 100.0
    %v262 = vmin.f32 %v246, 100.0
    %v263 = vmin.f32 %v247, 100.0
    %v264 = vmin.f32 %v248, 100.0
    %v265 = vmul.f32 %v73, %v249
    %v266 = vmul.f32 %v74, %v250
    %v267 = vmul.f32 %v75, %v251
    %v268 = vmul.f32 %v76, %v252
    %v269 = vmul.f32 %v77, %v253
    %v270 = vmul.f32 %v78, %v254
    %v271 = vmul.f32 %v79, %v255
    %v272 = vmul.f32 %v80, %v256
    %v273 = vmul.f32 %v81, %v257
    %v274 = vmul.f32 %v82, %v258
    %v275 = vmul.f32 %v83, %v259
    %v276 = vmul.f32 %v84, %v260
    %v277 = vmul.f32 %v85, %v261
    %v278 = vmul.f32 %v86, %v262
    %v279 = vmul.f32 %v87, %v263
    %v280 = vmul.f32 %v88, %v264
    %v281 = vsub.f32 1.0, %v73
    %v282 = vsub.f32 1.0, %v74
    %v283 = vsub.f32 1.0, %v75
    %v284 = vsub.f32 1.0, %v76
    %v285 = vsub.f32 1.0, %v77
    %v286 = vsub.f32 1.0, %v78
    %v287 = vsub.f32 1.0, %v79
    %v288 = vsub.f32 1.0, %v80
    %v289 = vsub.f32 1.0, %v81
    %v290 = vsub.f32 1.0, %v82
    %v291 = vsub.f32 1.0, %v83
    %v292 = vsub.f32 1.0, %v84
    %v293 = vsub.f32 1.0, %v85
    %v294 = vsub.f32 1.0, %v86
    %v295 = vsub.f32 1.0, %v87
    %v296 = vsub.f32 1.0, %v88
    %v297 = vmin.f32 %v217, 100.0
    %v298 = vmin.f32 %v218, 100.0
    %v299 = vmin.f32 %v219, 100.0
    %v300 = vmin.f32 %v220, 100.0
    %v301 = vmin.f32 %v221, 100.0
    %v302 = vmin.f32 %v222, 100.0
    %v303 = vmin.f32 %v223, 100.0
    %v304 = vmin.f32 %v224, 100.0
    %v305 = vmin.f32 %v225, 100.0
    %v306 = vmin.f32 %v226, 100.0
    %v307 = vmin.f32 %v227, 100.0
    %v308 = vmin.f32 %v228, 100.0
    %v309 = vmin.f32 %v229, 100.0
    %v310 = vmin.f32 %v230, 100.0
    %v311 = vmin.f32 %v231, 100.0
    %v312 = vmin.f32 %v232, 100.0
    %v313 = vmul.f32 %v281, %v297
    %v314 = vmul.f32 %v282, %v298
    %v315 = vmul.f32 %v283, %v299
    %v316 = vmul.f32 %v284, %v300
    %v317 = vmul.f32 %v285, %v301
    %v318 = vmul.f32 %v286, %v302
    %v319 = vmul.f32 %v287, %v303
    %v320 = vmul.f32 %v288, %v304
    %v321 = vmul.f32 %v289, %v305
    %v322 = vmul.f32 %v290, %v306
    %v323 = vmul.f32 %v291, %v307
    %v324 = vmul.f32 %v292, %v308
    %v325 = vmul.f32 %v293, %v309
    %v326 = vmul.f32 %v294, %v310
    %v327 = vmul.f32 %v295, %v311
    %v328 = vmul.f32 %v296, %v312
    %v329 = vadd.f32 %v265, %v313
    %v330 = vadd.f32 %v266, %v314
    %v331 = vadd.f32 %v267, %v315
    %v332 = vadd.f32 %v268, %v316
    %v333 = vadd.f32 %v269, %v317
    %v334 = vadd.f32 %v270, %v318
    %v335 = vadd.f32 %v271, %v319
    %v336 = vadd.f32 %v272, %v320
    %v337 = vadd.f32 %v273, %v321
    %v338 = vadd.f32 %v274, %v322
    %v339 = vadd.f32 %v275, %v323
    %v340 = vadd.f32 %v276, %v324
    %v341 = vadd.f32 %v277, %v325
    %v342 = vadd.f32 %v278, %v326
    %v343 = vadd.f32 %v279, %v327
    %v344 = vadd.f32 %v280, %v328
    %v345 = vld [vmem:[%s2] sm:$0xff]
    %vm346 = vcmask 130048
    %v347 = vsel %vm346, %v329, 0.0
    %v348 = vsel %vm346, %v330, 0.0
    %v349 = vadd.f32 %v347, %v348
    %v350 = vsel %vm346, %v331, 0.0
    %v351 = vadd.f32 %v349, %v350
    %v352 = vsel %vm346, %v332, 0.0
    %v353 = vadd.f32 %v351, %v352
    %v354 = vsel %vm346, %v333, 0.0
    %v355 = vadd.f32 %v353, %v354
    %v356 = vsel %vm346, %v334, 0.0
    %v357 = vadd.f32 %v355, %v356
    %v358 = vsel %vm346, %v335, 0.0
    %v359 = vadd.f32 %v357, %v358
    %v360 = vsel %vm346, %v336, 0.0
    %v361 = vadd.f32 %v359, %v360
    %v362 = vsel %vm346, %v337, 0.0
    %v363 = vadd.f32 %v361, %v362
    %v364 = vsel %vm346, %v338, 0.0
    %v365 = vadd.f32 %v363, %v364
    %v366 = vsel %vm346, %v339, 0.0
    %v367 = vadd.f32 %v365, %v366
    %v368 = vsel %vm346, %v340, 0.0
    %v369 = vadd.f32 %v367, %v368
    %v370 = vsel %vm346, %v341, 0.0
    %v371 = vadd.f32 %v369, %v370
    %v372 = vsel %vm346, %v342, 0.0
    %v373 = vadd.f32 %v371, %v372
    %v374 = vsel %vm346, %v343, 0.0
    %v375 = vadd.f32 %v373, %v374
    %v376 = vsel %vm346, %v344, 0.0
    %v377 = vadd.f32 %v375, %v376
    %v378 = vadd.f32 %v345, %v377
    %379 = vst.msk [vmem:[%s2] sm:$0xff] %vm346, %v378
    // Predicated region
    $region22: #{focal_loss.1} parent=1 // pred_check
      _
    $region23: #{focal_loss.1} parent=1 // pred_check_branch
      %381 = sbr.rel (0) target = $region25
    $region24: #{focal_loss.1} parent=1 // pred_region
      _
    $region25: #{focal_loss.1} parent=1 // pred_fallthru
      _
    // Predicated region
    $region26: #{focal_loss.1} parent=1 // pred_check
      _
    $region27: #{focal_loss.1} parent=1 // pred_check_branch
      %383 = sbr.rel (0) target = $region29
    $region28: #{focal_loss.1} parent=1 // pred_region
      _
    $region29: #{focal_loss.1} parent=1 // pred_fallthru
      _
    %384 = vsyncpa [#allocation3], 1
    %385 = vsyncpa [#allocation5], 1

</llo_original>
